<compile_context>
chip_gen: v7x
topology: tpu7x:2x2x1
jax: 0.10.0
libtpu: 0.0.40
codegen_flags: <defaults>
</compile_context>

<pallas_src>
import jax
import jax.numpy as jnp
from jax.experimental import pallas as pl
from jax.experimental.pallas import tpu as pltpu


def _encoder_lstm_step_kernel(ids_ref,      # SMEM (Bp,) int32      (scalar prefetch)
                              emb_hbm,      # ANY  (V, H)  f32      (embedding table, HBM)
                              w_ref,        # VMEM (2H, 4H) bf16    packed [W_ih^T ; W_hh^T]
                              b_ref,        # VMEM (1, 4H) f32      b_ih + b_hh
                              hc0_ref,      # VMEM (Bp, 2H) f32     packed [h0 | c0]
                              hc1_ref,      # VMEM (Bp, 2H) f32 out packed [h1 | c1]
                              x_buf,        # VMEM scratch (Bp, H) f32  gathered embeddings
                              sem):         # DMA semaphores (Bp,)
    bp, h = x_buf.shape

    # ---- Embedding gather: one row DMA per batch element, all in flight. ----
    copies = []
    for i in range(bp):
        cp = pltpu.make_async_copy(
            emb_hbm.at[pl.ds(ids_ref[i], 1)],   # (1, H) row of the HBM table
            x_buf.at[pl.ds(i, 1)],              # (1, H) destination row in VMEM
            sem.at[i])
        cp.start()
        copies.append(cp)
    for cp in copies:
        cp.wait()

    h0 = hc0_ref[:, 0:h]
    c0 = hc0_ref[:, h:2 * h]

    # ---- Single fused gate matmul (bf16 operands, f32 accumulation). ----
    xh = jnp.concatenate(
        [x_buf[...].astype(jnp.bfloat16), h0.astype(jnp.bfloat16)], axis=1)   # (Bp, 2H)
    gates = jnp.dot(xh, w_ref[...], preferred_element_type=jnp.float32) + b_ref[...]

    # PyTorch LSTM gate order [i, f, g, o]; all elementwise math in f32.
    i_g = jax.nn.sigmoid(gates[:, 0 * h:1 * h])
    f_g = jax.nn.sigmoid(gates[:, 1 * h:2 * h])
    g_g = jnp.tanh(gates[:, 2 * h:3 * h])
    o_g = jax.nn.sigmoid(gates[:, 3 * h:4 * h])

    c1 = f_g * c0 + i_g * g_g
    h1 = o_g * jnp.tanh(c1)

    # One lane-dense (Bp, 2H) store.
    hc1_ref[...] = jnp.concatenate([h1, c1], axis=1)


def encoder_rnn_forward(token_ids, hidden, params):
    """Pallas equivalent of EncoderRNN.forward (single timestep).

    token_ids: (B,) int32
    hidden:    tuple (h0, c0), each (1, B, H) float32
    params:    dict with 'embedding' (V,H) f32, 'w_packed' (2H,4H) bf16, 'bias' (1,4H) f32
    returns (output, (h1, c1)) with output/h1/c1 of shape (1, B, H) float32
    """
    h0, c0 = hidden
    B = token_ids.shape[0]
    H = params["embedding"].shape[1]
    Bp = ((B + 7) // 8) * 8                       # pad batch to the f32 sublane tile

    ids = jnp.zeros((Bp,), jnp.int32).at[:B].set(token_ids.astype(jnp.int32))
    hc0 = (jnp.zeros((Bp, 2 * H), jnp.float32)
           .at[:B, :H].set(h0.reshape(B, H))
           .at[:B, H:].set(c0.reshape(B, H)))

    grid_spec = pltpu.PrefetchScalarGridSpec(
        num_scalar_prefetch=1,                    # token ids -> SMEM scalars
        grid=(1,),
        in_specs=[
            pl.BlockSpec(memory_space=pl.ANY),                        # embedding stays in HBM
            pl.BlockSpec((2 * H, 4 * H), lambda i, ids: (0, 0)),      # packed weights (VMEM)
            pl.BlockSpec((1, 4 * H), lambda i, ids: (0, 0)),          # bias
            pl.BlockSpec((Bp, 2 * H), lambda i, ids: (0, 0)),         # [h0 | c0]
        ],
        out_specs=pl.BlockSpec((Bp, 2 * H), lambda i, ids: (0, 0)),   # [h1 | c1]
        scratch_shapes=[
            pltpu.VMEM((Bp, H), jnp.float32),
            pltpu.SemaphoreType.DMA((Bp,)),
        ],
    )

    hc1 = pl.pallas_call(
        _encoder_lstm_step_kernel,
        out_shape=jax.ShapeDtypeStruct((Bp, 2 * H), jnp.float32),
        grid_spec=grid_spec,
        compiler_params=pltpu.CompilerParams(
            dimension_semantics=("arbitrary",)),
    )(ids, params["embedding"], params["w_packed"], params["bias"], hc0)

    h1 = hc1[:B, :H].reshape(1, B, H)
    c1 = hc1[:B, H:].reshape(1, B, H)
    output = h1                                   # LSTM output for seq_len == 1 is h1
    return output, (h1, c1)


def init_params(key, vocab_size, hidden_size):
    k_emb, k_wih, k_whh, k_bih, k_bhh = jax.random.split(key, 5)
    scale = 1.0 / jnp.sqrt(hidden_size)
    embedding = jax.random.normal(k_emb, (vocab_size, hidden_size), jnp.float32)
    w_ih = jax.random.uniform(k_wih, (4 * hidden_size, hidden_size),
                              jnp.float32, -scale, scale)
    w_hh = jax.random.uniform(k_whh, (4 * hidden_size, hidden_size),
                              jnp.float32, -scale, scale)
    b_ih = jax.random.uniform(k_bih, (4 * hidden_size,), jnp.float32, -scale, scale)
    b_hh = jax.random.uniform(k_bhh, (4 * hidden_size,), jnp.float32, -scale, scale)
    return {
        "embedding": embedding,                                   # (V, H) f32, lives in HBM
        # Fused gate weights: [x | h] @ [W_ih^T ; W_hh^T] -> (B, 4H); bf16 MXU operands.
        "w_packed": jnp.concatenate([w_ih.T, w_hh.T], axis=0).astype(jnp.bfloat16),
        "bias": (b_ih + b_hh).reshape(1, 4 * hidden_size),        # f32
    }


def init_hidden(batch_size, hidden_size):
    # EncoderRNN.init_hidden returns a single zeros tensor; an LSTM needs (h, c),
    # so zeros are supplied for both (standard initial state).
    z = jnp.zeros((1, batch_size, hidden_size), jnp.float32)
    return (z, z)


def _reference_step(token_ids, hidden, params):
    """Pure-JAX reference mirroring the kernel's mixed precision."""
    h0, c0 = hidden
    B = token_ids.shape[0]
    H = params["embedding"].shape[1]
    x = params["embedding"][token_ids]                            # (B, H) f32
    xh = jnp.concatenate([x, h0.reshape(B, H)], axis=1)
    xh = xh.astype(jnp.bfloat16).astype(jnp.float32)
    w = params["w_packed"].astype(jnp.float32)
    gates = xh @ w + params["bias"]
    i_g = jax.nn.sigmoid(gates[:, 0 * H:1 * H])
    f_g = jax.nn.sigmoid(gates[:, 1 * H:2 * H])
    g_g = jnp.tanh(gates[:, 2 * H:3 * H])
    o_g = jax.nn.sigmoid(gates[:, 3 * H:4 * H])
    c1 = f_g * c0.reshape(B, H) + i_g * g_g
    h1 = o_g * jnp.tanh(c1)
    return h1, c1


if __name__ == "__main__":
    VOCAB = 256
    HIDDEN = 128     # multiple of 128 -> lane-aligned gate slices
    BATCH = 2        # padded to 8 internally

    key = jax.random.PRNGKey(0)
    k_params, k_ids = jax.random.split(key)

    params = init_params(k_params, VOCAB, HIDDEN)
    token_ids = jax.random.randint(k_ids, (BATCH,), 0, VOCAB, dtype=jnp.int32)
    hidden = init_hidden(BATCH, HIDDEN)

    output, (h1, c1) = encoder_rnn_forward(token_ids, hidden, params)
    jax.block_until_ready((output, h1, c1))

    assert output.shape == (1, BATCH, HIDDEN)
    assert h1.shape == (1, BATCH, HIDDEN) and c1.shape == (1, BATCH, HIDDEN)

    h_ref, c_ref = _reference_step(token_ids, hidden, params)
    assert jnp.allclose(h1[0], h_ref, atol=1e-2, rtol=1e-2)
    assert jnp.allclose(c1[0], c_ref, atol=1e-2, rtol=1e-2)

    print("KERNEL_OK")
</pallas_src>

<mosaic_0001>
module attributes {stable_mosaic.version = 11 : i64} {
  func.func @_encoder_lstm_step_kernel(%arg0: i32, %arg1: memref<8xi32, #tpu.memory_space<smem>>, %arg2: memref<256x128xf32, #tpu.memory_space<any>>, %arg3: memref<256x512xbf16, #tpu.memory_space<vmem>>, %arg4: memref<1x512xf32, #tpu.memory_space<vmem>>, %arg5: memref<8x256xf32, #tpu.memory_space<vmem>>, %arg6: memref<8x256xf32, #tpu.memory_space<vmem>>, %arg7: memref<8x128xf32, #tpu.memory_space<vmem>>, %arg8: memref<8x!tpu.dma_semaphore, #tpu.memory_space<semaphore_mem>>) attributes {dimension_semantics = [#tpu.dimension_semantics<arbitrary>], iteration_bounds = array<i64: 1>, scalar_prefetch = 1 : i64, scratch_operands = 2 : i64, tpu.core_type = #tpu.core_type<tc>, window_params = [{}, {pipeline_mode = #tpu.pipeline_mode<synchronous>, transform_indices = @transform_1, window_bounds = array<i64: 256, 512>}, {pipeline_mode = #tpu.pipeline_mode<synchronous>, transform_indices = @transform_2, window_bounds = array<i64: 1, 512>}, {pipeline_mode = #tpu.pipeline_mode<synchronous>, transform_indices = @transform_3, window_bounds = array<i64: 8, 256>}, {pipeline_mode = #tpu.pipeline_mode<synchronous>, transform_indices = @transform_4, window_bounds = array<i64: 8, 256>}]} {
    %c0 = arith.constant 0 : index
    %0 = memref.load %arg1[%c0] : memref<8xi32, #tpu.memory_space<smem>>
    %c0_i32 = arith.constant 0 : i32
    %c0_i32_0 = arith.constant 0 : i32
    %1 = tpu.memref_slice %arg2[%0, %c0_i32_0] : memref<256x128xf32, #tpu.memory_space<any>> -> memref<1x128xf32, #tpu.memory_space<any>>
    %c0_i32_1 = arith.constant 0 : i32
    %c0_i32_2 = arith.constant 0 : i32
    %2 = tpu.memref_slice %arg7[%c0_i32_1, %c0_i32_2] : memref<8x128xf32, #tpu.memory_space<vmem>> -> memref<1x128xf32, #tpu.memory_space<vmem>>
    %3 = tpu.memref_slice %arg8[%c0_i32] : memref<8x!tpu.dma_semaphore, #tpu.memory_space<semaphore_mem>> -> memref<1x!tpu.dma_semaphore, #tpu.memory_space<semaphore_mem>>
    %4 = tpu.memref_squeeze %3 : memref<1x!tpu.dma_semaphore, #tpu.memory_space<semaphore_mem>> -> memref<!tpu.dma_semaphore, #tpu.memory_space<semaphore_mem>>
    tpu.enqueue_dma source(%1 : memref<1x128xf32, #tpu.memory_space<any>>) target(%2 : memref<1x128xf32, #tpu.memory_space<vmem>>) target_semaphore(%4 : memref<!tpu.dma_semaphore, #tpu.memory_space<semaphore_mem>>)
    %c1 = arith.constant 1 : index
    %5 = memref.load %arg1[%c1] : memref<8xi32, #tpu.memory_space<smem>>
    %c1_i32 = arith.constant 1 : i32
    %c0_i32_3 = arith.constant 0 : i32
    %6 = tpu.memref_slice %arg2[%5, %c0_i32_3] : memref<256x128xf32, #tpu.memory_space<any>> -> memref<1x128xf32, #tpu.memory_space<any>>
    %c1_i32_4 = arith.constant 1 : i32
    %c0_i32_5 = arith.constant 0 : i32
    %7 = tpu.memref_slice %arg7[%c1_i32_4, %c0_i32_5] : memref<8x128xf32, #tpu.memory_space<vmem>> -> memref<1x128xf32, #tpu.memory_space<vmem>>
    %8 = tpu.memref_slice %arg8[%c1_i32] : memref<8x!tpu.dma_semaphore, #tpu.memory_space<semaphore_mem>> -> memref<1x!tpu.dma_semaphore, #tpu.memory_space<semaphore_mem>>
    %9 = tpu.memref_squeeze %8 : memref<1x!tpu.dma_semaphore, #tpu.memory_space<semaphore_mem>> -> memref<!tpu.dma_semaphore, #tpu.memory_space<semaphore_mem>>
    tpu.enqueue_dma source(%6 : memref<1x128xf32, #tpu.memory_space<any>>) target(%7 : memref<1x128xf32, #tpu.memory_space<vmem>>) target_semaphore(%9 : memref<!tpu.dma_semaphore, #tpu.memory_space<semaphore_mem>>)
    %c2 = arith.constant 2 : index
    %10 = memref.load %arg1[%c2] : memref<8xi32, #tpu.memory_space<smem>>
    %c2_i32 = arith.constant 2 : i32
    %c0_i32_6 = arith.constant 0 : i32
    %11 = tpu.memref_slice %arg2[%10, %c0_i32_6] : memref<256x128xf32, #tpu.memory_space<any>> -> memref<1x128xf32, #tpu.memory_space<any>>
    %c2_i32_7 = arith.constant 2 : i32
    %c0_i32_8 = arith.constant 0 : i32
    %12 = tpu.memref_slice %arg7[%c2_i32_7, %c0_i32_8] : memref<8x128xf32, #tpu.memory_space<vmem>> -> memref<1x128xf32, #tpu.memory_space<vmem>>
    %13 = tpu.memref_slice %arg8[%c2_i32] : memref<8x!tpu.dma_semaphore, #tpu.memory_space<semaphore_mem>> -> memref<1x!tpu.dma_semaphore, #tpu.memory_space<semaphore_mem>>
    %14 = tpu.memref_squeeze %13 : memref<1x!tpu.dma_semaphore, #tpu.memory_space<semaphore_mem>> -> memref<!tpu.dma_semaphore, #tpu.memory_space<semaphore_mem>>
    tpu.enqueue_dma source(%11 : memref<1x128xf32, #tpu.memory_space<any>>) target(%12 : memref<1x128xf32, #tpu.memory_space<vmem>>) target_semaphore(%14 : memref<!tpu.dma_semaphore, #tpu.memory_space<semaphore_mem>>)
    %c3 = arith.constant 3 : index
    %15 = memref.load %arg1[%c3] : memref<8xi32, #tpu.memory_space<smem>>
    %c3_i32 = arith.constant 3 : i32
    %c0_i32_9 = arith.constant 0 : i32
    %16 = tpu.memref_slice %arg2[%15, %c0_i32_9] : memref<256x128xf32, #tpu.memory_space<any>> -> memref<1x128xf32, #tpu.memory_space<any>>
    %c3_i32_10 = arith.constant 3 : i32
    %c0_i32_11 = arith.constant 0 : i32
    %17 = tpu.memref_slice %arg7[%c3_i32_10, %c0_i32_11] : memref<8x128xf32, #tpu.memory_space<vmem>> -> memref<1x128xf32, #tpu.memory_space<vmem>>
    %18 = tpu.memref_slice %arg8[%c3_i32] : memref<8x!tpu.dma_semaphore, #tpu.memory_space<semaphore_mem>> -> memref<1x!tpu.dma_semaphore, #tpu.memory_space<semaphore_mem>>
    %19 = tpu.memref_squeeze %18 : memref<1x!tpu.dma_semaphore, #tpu.memory_space<semaphore_mem>> -> memref<!tpu.dma_semaphore, #tpu.memory_space<semaphore_mem>>
    tpu.enqueue_dma source(%16 : memref<1x128xf32, #tpu.memory_space<any>>) target(%17 : memref<1x128xf32, #tpu.memory_space<vmem>>) target_semaphore(%19 : memref<!tpu.dma_semaphore, #tpu.memory_space<semaphore_mem>>)
    %c4 = arith.constant 4 : index
    %20 = memref.load %arg1[%c4] : memref<8xi32, #tpu.memory_space<smem>>
    %c4_i32 = arith.constant 4 : i32
    %c0_i32_12 = arith.constant 0 : i32
    %21 = tpu.memref_slice %arg2[%20, %c0_i32_12] : memref<256x128xf32, #tpu.memory_space<any>> -> memref<1x128xf32, #tpu.memory_space<any>>
    %c4_i32_13 = arith.constant 4 : i32
    %c0_i32_14 = arith.constant 0 : i32
    %22 = tpu.memref_slice %arg7[%c4_i32_13, %c0_i32_14] : memref<8x128xf32, #tpu.memory_space<vmem>> -> memref<1x128xf32, #tpu.memory_space<vmem>>
    %23 = tpu.memref_slice %arg8[%c4_i32] : memref<8x!tpu.dma_semaphore, #tpu.memory_space<semaphore_mem>> -> memref<1x!tpu.dma_semaphore, #tpu.memory_space<semaphore_mem>>
    %24 = tpu.memref_squeeze %23 : memref<1x!tpu.dma_semaphore, #tpu.memory_space<semaphore_mem>> -> memref<!tpu.dma_semaphore, #tpu.memory_space<semaphore_mem>>
    tpu.enqueue_dma source(%21 : memref<1x128xf32, #tpu.memory_space<any>>) target(%22 : memref<1x128xf32, #tpu.memory_space<vmem>>) target_semaphore(%24 : memref<!tpu.dma_semaphore, #tpu.memory_space<semaphore_mem>>)
    %c5 = arith.constant 5 : index
    %25 = memref.load %arg1[%c5] : memref<8xi32, #tpu.memory_space<smem>>
    %c5_i32 = arith.constant 5 : i32
    %c0_i32_15 = arith.constant 0 : i32
    %26 = tpu.memref_slice %arg2[%25, %c0_i32_15] : memref<256x128xf32, #tpu.memory_space<any>> -> memref<1x128xf32, #tpu.memory_space<any>>
    %c5_i32_16 = arith.constant 5 : i32
    %c0_i32_17 = arith.constant 0 : i32
    %27 = tpu.memref_slice %arg7[%c5_i32_16, %c0_i32_17] : memref<8x128xf32, #tpu.memory_space<vmem>> -> memref<1x128xf32, #tpu.memory_space<vmem>>
    %28 = tpu.memref_slice %arg8[%c5_i32] : memref<8x!tpu.dma_semaphore, #tpu.memory_space<semaphore_mem>> -> memref<1x!tpu.dma_semaphore, #tpu.memory_space<semaphore_mem>>
    %29 = tpu.memref_squeeze %28 : memref<1x!tpu.dma_semaphore, #tpu.memory_space<semaphore_mem>> -> memref<!tpu.dma_semaphore, #tpu.memory_space<semaphore_mem>>
    tpu.enqueue_dma source(%26 : memref<1x128xf32, #tpu.memory_space<any>>) target(%27 : memref<1x128xf32, #tpu.memory_space<vmem>>) target_semaphore(%29 : memref<!tpu.dma_semaphore, #tpu.memory_space<semaphore_mem>>)
    %c6 = arith.constant 6 : index
    %30 = memref.load %arg1[%c6] : memref<8xi32, #tpu.memory_space<smem>>
    %c6_i32 = arith.constant 6 : i32
    %c0_i32_18 = arith.constant 0 : i32
    %31 = tpu.memref_slice %arg2[%30, %c0_i32_18] : memref<256x128xf32, #tpu.memory_space<any>> -> memref<1x128xf32, #tpu.memory_space<any>>
    %c6_i32_19 = arith.constant 6 : i32
    %c0_i32_20 = arith.constant 0 : i32
    %32 = tpu.memref_slice %arg7[%c6_i32_19, %c0_i32_20] : memref<8x128xf32, #tpu.memory_space<vmem>> -> memref<1x128xf32, #tpu.memory_space<vmem>>
    %33 = tpu.memref_slice %arg8[%c6_i32] : memref<8x!tpu.dma_semaphore, #tpu.memory_space<semaphore_mem>> -> memref<1x!tpu.dma_semaphore, #tpu.memory_space<semaphore_mem>>
    %34 = tpu.memref_squeeze %33 : memref<1x!tpu.dma_semaphore, #tpu.memory_space<semaphore_mem>> -> memref<!tpu.dma_semaphore, #tpu.memory_space<semaphore_mem>>
    tpu.enqueue_dma source(%31 : memref<1x128xf32, #tpu.memory_space<any>>) target(%32 : memref<1x128xf32, #tpu.memory_space<vmem>>) target_semaphore(%34 : memref<!tpu.dma_semaphore, #tpu.memory_space<semaphore_mem>>)
    %c7 = arith.constant 7 : index
    %35 = memref.load %arg1[%c7] : memref<8xi32, #tpu.memory_space<smem>>
    %c7_i32 = arith.constant 7 : i32
    %c0_i32_21 = arith.constant 0 : i32
    %36 = tpu.memref_slice %arg2[%35, %c0_i32_21] : memref<256x128xf32, #tpu.memory_space<any>> -> memref<1x128xf32, #tpu.memory_space<any>>
    %c7_i32_22 = arith.constant 7 : i32
    %c0_i32_23 = arith.constant 0 : i32
    %37 = tpu.memref_slice %arg7[%c7_i32_22, %c0_i32_23] : memref<8x128xf32, #tpu.memory_space<vmem>> -> memref<1x128xf32, #tpu.memory_space<vmem>>
    %38 = tpu.memref_slice %arg8[%c7_i32] : memref<8x!tpu.dma_semaphore, #tpu.memory_space<semaphore_mem>> -> memref<1x!tpu.dma_semaphore, #tpu.memory_space<semaphore_mem>>
    %39 = tpu.memref_squeeze %38 : memref<1x!tpu.dma_semaphore, #tpu.memory_space<semaphore_mem>> -> memref<!tpu.dma_semaphore, #tpu.memory_space<semaphore_mem>>
    tpu.enqueue_dma source(%36 : memref<1x128xf32, #tpu.memory_space<any>>) target(%37 : memref<1x128xf32, #tpu.memory_space<vmem>>) target_semaphore(%39 : memref<!tpu.dma_semaphore, #tpu.memory_space<semaphore_mem>>)
    %c0_i32_24 = arith.constant 0 : i32
    %c0_i32_25 = arith.constant 0 : i32
    %40 = tpu.memref_slice %arg2[%0, %c0_i32_25] : memref<256x128xf32, #tpu.memory_space<any>> -> memref<1x128xf32, #tpu.memory_space<any>>
    %c0_i32_26 = arith.constant 0 : i32
    %c0_i32_27 = arith.constant 0 : i32
    %41 = tpu.memref_slice %arg7[%c0_i32_26, %c0_i32_27] : memref<8x128xf32, #tpu.memory_space<vmem>> -> memref<1x128xf32, #tpu.memory_space<vmem>>
    %42 = tpu.memref_slice %arg8[%c0_i32_24] : memref<8x!tpu.dma_semaphore, #tpu.memory_space<semaphore_mem>> -> memref<1x!tpu.dma_semaphore, #tpu.memory_space<semaphore_mem>>
    %43 = tpu.memref_squeeze %42 : memref<1x!tpu.dma_semaphore, #tpu.memory_space<semaphore_mem>> -> memref<!tpu.dma_semaphore, #tpu.memory_space<semaphore_mem>>
    tpu.wait_dma2 semaphore(%43 : memref<!tpu.dma_semaphore, #tpu.memory_space<semaphore_mem>>) src(%40 : memref<1x128xf32, #tpu.memory_space<any>>) dst(%41 : memref<1x128xf32, #tpu.memory_space<vmem>>)
    %c1_i32_28 = arith.constant 1 : i32
    %c0_i32_29 = arith.constant 0 : i32
    %44 = tpu.memref_slice %arg2[%5, %c0_i32_29] : memref<256x128xf32, #tpu.memory_space<any>> -> memref<1x128xf32, #tpu.memory_space<any>>
    %c1_i32_30 = arith.constant 1 : i32
    %c0_i32_31 = arith.constant 0 : i32
    %45 = tpu.memref_slice %arg7[%c1_i32_30, %c0_i32_31] : memref<8x128xf32, #tpu.memory_space<vmem>> -> memref<1x128xf32, #tpu.memory_space<vmem>>
    %46 = tpu.memref_slice %arg8[%c1_i32_28] : memref<8x!tpu.dma_semaphore, #tpu.memory_space<semaphore_mem>> -> memref<1x!tpu.dma_semaphore, #tpu.memory_space<semaphore_mem>>
    %47 = tpu.memref_squeeze %46 : memref<1x!tpu.dma_semaphore, #tpu.memory_space<semaphore_mem>> -> memref<!tpu.dma_semaphore, #tpu.memory_space<semaphore_mem>>
    tpu.wait_dma2 semaphore(%47 : memref<!tpu.dma_semaphore, #tpu.memory_space<semaphore_mem>>) src(%44 : memref<1x128xf32, #tpu.memory_space<any>>) dst(%45 : memref<1x128xf32, #tpu.memory_space<vmem>>)
    %c2_i32_32 = arith.constant 2 : i32
    %c0_i32_33 = arith.constant 0 : i32
    %48 = tpu.memref_slice %arg2[%10, %c0_i32_33] : memref<256x128xf32, #tpu.memory_space<any>> -> memref<1x128xf32, #tpu.memory_space<any>>
    %c2_i32_34 = arith.constant 2 : i32
    %c0_i32_35 = arith.constant 0 : i32
    %49 = tpu.memref_slice %arg7[%c2_i32_34, %c0_i32_35] : memref<8x128xf32, #tpu.memory_space<vmem>> -> memref<1x128xf32, #tpu.memory_space<vmem>>
    %50 = tpu.memref_slice %arg8[%c2_i32_32] : memref<8x!tpu.dma_semaphore, #tpu.memory_space<semaphore_mem>> -> memref<1x!tpu.dma_semaphore, #tpu.memory_space<semaphore_mem>>
    %51 = tpu.memref_squeeze %50 : memref<1x!tpu.dma_semaphore, #tpu.memory_space<semaphore_mem>> -> memref<!tpu.dma_semaphore, #tpu.memory_space<semaphore_mem>>
    tpu.wait_dma2 semaphore(%51 : memref<!tpu.dma_semaphore, #tpu.memory_space<semaphore_mem>>) src(%48 : memref<1x128xf32, #tpu.memory_space<any>>) dst(%49 : memref<1x128xf32, #tpu.memory_space<vmem>>)
    %c3_i32_36 = arith.constant 3 : i32
    %c0_i32_37 = arith.constant 0 : i32
    %52 = tpu.memref_slice %arg2[%15, %c0_i32_37] : memref<256x128xf32, #tpu.memory_space<any>> -> memref<1x128xf32, #tpu.memory_space<any>>
    %c3_i32_38 = arith.constant 3 : i32
    %c0_i32_39 = arith.constant 0 : i32
    %53 = tpu.memref_slice %arg7[%c3_i32_38, %c0_i32_39] : memref<8x128xf32, #tpu.memory_space<vmem>> -> memref<1x128xf32, #tpu.memory_space<vmem>>
    %54 = tpu.memref_slice %arg8[%c3_i32_36] : memref<8x!tpu.dma_semaphore, #tpu.memory_space<semaphore_mem>> -> memref<1x!tpu.dma_semaphore, #tpu.memory_space<semaphore_mem>>
    %55 = tpu.memref_squeeze %54 : memref<1x!tpu.dma_semaphore, #tpu.memory_space<semaphore_mem>> -> memref<!tpu.dma_semaphore, #tpu.memory_space<semaphore_mem>>
    tpu.wait_dma2 semaphore(%55 : memref<!tpu.dma_semaphore, #tpu.memory_space<semaphore_mem>>) src(%52 : memref<1x128xf32, #tpu.memory_space<any>>) dst(%53 : memref<1x128xf32, #tpu.memory_space<vmem>>)
    %c4_i32_40 = arith.constant 4 : i32
    %c0_i32_41 = arith.constant 0 : i32
    %56 = tpu.memref_slice %arg2[%20, %c0_i32_41] : memref<256x128xf32, #tpu.memory_space<any>> -> memref<1x128xf32, #tpu.memory_space<any>>
    %c4_i32_42 = arith.constant 4 : i32
    %c0_i32_43 = arith.constant 0 : i32
    %57 = tpu.memref_slice %arg7[%c4_i32_42, %c0_i32_43] : memref<8x128xf32, #tpu.memory_space<vmem>> -> memref<1x128xf32, #tpu.memory_space<vmem>>
    %58 = tpu.memref_slice %arg8[%c4_i32_40] : memref<8x!tpu.dma_semaphore, #tpu.memory_space<semaphore_mem>> -> memref<1x!tpu.dma_semaphore, #tpu.memory_space<semaphore_mem>>
    %59 = tpu.memref_squeeze %58 : memref<1x!tpu.dma_semaphore, #tpu.memory_space<semaphore_mem>> -> memref<!tpu.dma_semaphore, #tpu.memory_space<semaphore_mem>>
    tpu.wait_dma2 semaphore(%59 : memref<!tpu.dma_semaphore, #tpu.memory_space<semaphore_mem>>) src(%56 : memref<1x128xf32, #tpu.memory_space<any>>) dst(%57 : memref<1x128xf32, #tpu.memory_space<vmem>>)
    %c5_i32_44 = arith.constant 5 : i32
    %c0_i32_45 = arith.constant 0 : i32
    %60 = tpu.memref_slice %arg2[%25, %c0_i32_45] : memref<256x128xf32, #tpu.memory_space<any>> -> memref<1x128xf32, #tpu.memory_space<any>>
    %c5_i32_46 = arith.constant 5 : i32
    %c0_i32_47 = arith.constant 0 : i32
    %61 = tpu.memref_slice %arg7[%c5_i32_46, %c0_i32_47] : memref<8x128xf32, #tpu.memory_space<vmem>> -> memref<1x128xf32, #tpu.memory_space<vmem>>
    %62 = tpu.memref_slice %arg8[%c5_i32_44] : memref<8x!tpu.dma_semaphore, #tpu.memory_space<semaphore_mem>> -> memref<1x!tpu.dma_semaphore, #tpu.memory_space<semaphore_mem>>
    %63 = tpu.memref_squeeze %62 : memref<1x!tpu.dma_semaphore, #tpu.memory_space<semaphore_mem>> -> memref<!tpu.dma_semaphore, #tpu.memory_space<semaphore_mem>>
    tpu.wait_dma2 semaphore(%63 : memref<!tpu.dma_semaphore, #tpu.memory_space<semaphore_mem>>) src(%60 : memref<1x128xf32, #tpu.memory_space<any>>) dst(%61 : memref<1x128xf32, #tpu.memory_space<vmem>>)
    %c6_i32_48 = arith.constant 6 : i32
    %c0_i32_49 = arith.constant 0 : i32
    %64 = tpu.memref_slice %arg2[%30, %c0_i32_49] : memref<256x128xf32, #tpu.memory_space<any>> -> memref<1x128xf32, #tpu.memory_space<any>>
    %c6_i32_50 = arith.constant 6 : i32
    %c0_i32_51 = arith.constant 0 : i32
    %65 = tpu.memref_slice %arg7[%c6_i32_50, %c0_i32_51] : memref<8x128xf32, #tpu.memory_space<vmem>> -> memref<1x128xf32, #tpu.memory_space<vmem>>
    %66 = tpu.memref_slice %arg8[%c6_i32_48] : memref<8x!tpu.dma_semaphore, #tpu.memory_space<semaphore_mem>> -> memref<1x!tpu.dma_semaphore, #tpu.memory_space<semaphore_mem>>
    %67 = tpu.memref_squeeze %66 : memref<1x!tpu.dma_semaphore, #tpu.memory_space<semaphore_mem>> -> memref<!tpu.dma_semaphore, #tpu.memory_space<semaphore_mem>>
    tpu.wait_dma2 semaphore(%67 : memref<!tpu.dma_semaphore, #tpu.memory_space<semaphore_mem>>) src(%64 : memref<1x128xf32, #tpu.memory_space<any>>) dst(%65 : memref<1x128xf32, #tpu.memory_space<vmem>>)
    %c7_i32_52 = arith.constant 7 : i32
    %c0_i32_53 = arith.constant 0 : i32
    %68 = tpu.memref_slice %arg2[%35, %c0_i32_53] : memref<256x128xf32, #tpu.memory_space<any>> -> memref<1x128xf32, #tpu.memory_space<any>>
    %c7_i32_54 = arith.constant 7 : i32
    %c0_i32_55 = arith.constant 0 : i32
    %69 = tpu.memref_slice %arg7[%c7_i32_54, %c0_i32_55] : memref<8x128xf32, #tpu.memory_space<vmem>> -> memref<1x128xf32, #tpu.memory_space<vmem>>
    %70 = tpu.memref_slice %arg8[%c7_i32_52] : memref<8x!tpu.dma_semaphore, #tpu.memory_space<semaphore_mem>> -> memref<1x!tpu.dma_semaphore, #tpu.memory_space<semaphore_mem>>
    %71 = tpu.memref_squeeze %70 : memref<1x!tpu.dma_semaphore, #tpu.memory_space<semaphore_mem>> -> memref<!tpu.dma_semaphore, #tpu.memory_space<semaphore_mem>>
    tpu.wait_dma2 semaphore(%71 : memref<!tpu.dma_semaphore, #tpu.memory_space<semaphore_mem>>) src(%68 : memref<1x128xf32, #tpu.memory_space<any>>) dst(%69 : memref<1x128xf32, #tpu.memory_space<vmem>>)
    %c0_56 = arith.constant 0 : index
    %c0_57 = arith.constant 0 : index
    %72 = vector.load %arg5[%c0_56, %c0_57] : memref<8x256xf32, #tpu.memory_space<vmem>>, vector<8x128xf32>
    %c0_58 = arith.constant 0 : index
    %c128 = arith.constant 128 : index
    %73 = vector.load %arg5[%c0_58, %c128] : memref<8x256xf32, #tpu.memory_space<vmem>>, vector<8x128xf32>
    %c0_59 = arith.constant 0 : index
    %c0_60 = arith.constant 0 : index
    %74 = vector.load %arg7[%c0_59, %c0_60] : memref<8x128xf32, #tpu.memory_space<vmem>>, vector<8x128xf32>
    %75 = arith.truncf %74 : vector<8x128xf32> to vector<8x128xbf16>
    %76 = arith.truncf %72 : vector<8x128xf32> to vector<8x128xbf16>
    %77 = tpu.concatenate %75, %76 in 1 : vector<8x128xbf16>, vector<8x128xbf16> -> vector<8x256xbf16>
    %c0_61 = arith.constant 0 : index
    %c0_62 = arith.constant 0 : index
    %78 = vector.load %arg3[%c0_61, %c0_62] : memref<256x512xbf16, #tpu.memory_space<vmem>>, vector<256x512xbf16>
    %cst = arith.constant dense<0.000000e+00> : vector<8x512xf32>
    %79 = tpu.matmul %77, %78, %cst {dimension_numbers = #tpu.dot_dimension_numbers<[1], [0], [0], [1], [0, 0, 1, 1], [], []>} : vector<8x256xbf16>, vector<256x512xbf16>, vector<8x512xf32> -> vector<8x512xf32>
    %c0_63 = arith.constant 0 : index
    %c0_64 = arith.constant 0 : index
    %80 = vector.load %arg4[%c0_63, %c0_64] : memref<1x512xf32, #tpu.memory_space<vmem>>, vector<1x512xf32>
    %81 = vector.broadcast %80 : vector<1x512xf32> to vector<8x512xf32>
    %82 = arith.addf %79, %81 : vector<8x512xf32>
    %83 = vector.extract_strided_slice %82 {offsets = [0, 0], sizes = [8, 128], strides = [1, 1]} : vector<8x512xf32> to vector<8x128xf32>
    %84 = arith.negf %83 : vector<8x128xf32>
    %85 = math.exp %84 : vector<8x128xf32>
    %cst_65 = arith.constant 1.000000e+00 : f32
    %86 = vector.broadcast %cst_65 : f32 to vector<8x128xf32>
    %87 = arith.addf %86, %85 : vector<8x128xf32>
    %88 = arith.divf %86, %87 : vector<8x128xf32>
    %89 = vector.extract_strided_slice %82 {offsets = [0, 128], sizes = [8, 128], strides = [1, 1]} : vector<8x512xf32> to vector<8x128xf32>
    %90 = arith.negf %89 : vector<8x128xf32>
    %91 = math.exp %90 : vector<8x128xf32>
    %cst_66 = arith.constant 1.000000e+00 : f32
    %92 = vector.broadcast %cst_66 : f32 to vector<8x128xf32>
    %93 = arith.addf %92, %91 : vector<8x128xf32>
    %94 = arith.divf %92, %93 : vector<8x128xf32>
    %95 = vector.extract_strided_slice %82 {offsets = [0, 256], sizes = [8, 128], strides = [1, 1]} : vector<8x512xf32> to vector<8x128xf32>
    %96 = math.tanh %95 : vector<8x128xf32>
    %97 = vector.extract_strided_slice %82 {offsets = [0, 384], sizes = [8, 128], strides = [1, 1]} : vector<8x512xf32> to vector<8x128xf32>
    %98 = arith.negf %97 : vector<8x128xf32>
    %99 = math.exp %98 : vector<8x128xf32>
    %cst_67 = arith.constant 1.000000e+00 : f32
    %100 = vector.broadcast %cst_67 : f32 to vector<8x128xf32>
    %101 = arith.addf %100, %99 : vector<8x128xf32>
    %102 = arith.divf %100, %101 : vector<8x128xf32>
    %103 = arith.mulf %94, %73 : vector<8x128xf32>
    %104 = arith.mulf %88, %96 : vector<8x128xf32>
    %105 = arith.addf %103, %104 : vector<8x128xf32>
    %106 = math.tanh %105 : vector<8x128xf32>
    %107 = arith.mulf %102, %106 : vector<8x128xf32>
    %108 = tpu.concatenate %107, %105 in 1 : vector<8x128xf32>, vector<8x128xf32> -> vector<8x256xf32>
    %c0_68 = arith.constant 0 : index
    %c0_69 = arith.constant 0 : index
    %109 = vector.load %arg6[%c0_68, %c0_69] : memref<8x256xf32, #tpu.memory_space<vmem>>, vector<8x256xf32>
    tpu.vector_store %arg6[%c0_68, %c0_69], %108 {strides = array<i32>} : memref<8x256xf32, #tpu.memory_space<vmem>>, vector<8x256xf32>,
    return
  }
  func.func @transform_1(%arg0: i32, %arg1: memref<8xi32, #tpu.memory_space<smem>>) -> (i32, i32) {
    %c0_i32 = arith.constant 0 : i32
    %c0_i32_0 = arith.constant 0 : i32
    %c0_i32_1 = arith.constant 0 : i32
    return %c0_i32, %c0_i32_0 : i32, i32
  }
  func.func @transform_2(%arg0: i32, %arg1: memref<8xi32, #tpu.memory_space<smem>>) -> (i32, i32) {
    %c0_i32 = arith.constant 0 : i32
    %c0_i32_0 = arith.constant 0 : i32
    %c0_i32_1 = arith.constant 0 : i32
    return %c0_i32, %c0_i32_0 : i32, i32
  }
  func.func @transform_3(%arg0: i32, %arg1: memref<8xi32, #tpu.memory_space<smem>>) -> (i32, i32) {
    %c0_i32 = arith.constant 0 : i32
    %c0_i32_0 = arith.constant 0 : i32
    %c0_i32_1 = arith.constant 0 : i32
    return %c0_i32, %c0_i32_0 : i32, i32
  }
  func.func @transform_4(%arg0: i32, %arg1: memref<8xi32, #tpu.memory_space<smem>>) -> (i32, i32) {
    %c0_i32 = arith.constant 0 : i32
    %c0_i32_0 = arith.constant 0 : i32
    %c0_i32_1 = arith.constant 0 : i32
    return %c0_i32, %c0_i32_0 : i32, i32
  }
}

</mosaic_0001>

<llo_original>
// kernel: tpu_custom_call.1
$region0: #{tpu_custom_call.1}
  #allocation0 [shape = 'u32[]', space=smem, size = 0x4, offset = 0x4, fixed_abs, tag = 'smem constant byte address 0x4 - core index']
  #allocation1 [shape = 'u32[144,128]{1,0:T(1,128)}', space=vmem, size = 0x12000, scoped, tag = 'internal scratch']
  #allocation2 [shape = 'f32[8,128]{1,0:T(8,128)}', space=vmem, size = 0x1000, scoped, tag = 'scratch operand']
  #allocation3 [shape = 's32[8]{0}', space=sflag, size = 0x20, scoped, tag = 'scratch operand']
  #allocation4 [shape = 's32[1]{0}', space=sflag, size = 0x4, scoped, tag = 'scoped memory for tpu_custom_call.1']
  #allocation5 [shape = 'u8[512]{0}', space=smem, size = 0x200, scoped, tag = 'prefetched SMEM operand 0']
  #allocation12 [shape = 's32[]', space=sflag, size = 0x4, offset = 0, fixed_abs, tag = 'sflag constant byte address 0x0 - dummy sync flag']
  #allocation13 [shape = 's32[]', space=sflag, size = 0x4, offset = 0, fixed_abs, tag = 'sflag constant byte address 0x0 - dummy sync flag']
  #allocation14 [shape = 'u32[]', space=smem, size = 0x4, offset = 0x44, fixed_abs, tag = 'smem constant byte address 0x44 - assertion arg 0']
  #allocation15 [shape = 'u32[]', space=smem, size = 0x4, offset = 0x48, fixed_abs, tag = 'smem constant byte address 0x48 - assertion arg 1']
  #allocation16 [shape = 's32[]', space=sflag, size = 0x4, offset = 0, fixed_abs, tag = 'sflag constant byte address 0x0 - dummy sync flag']
  #allocation17 [shape = 's32[]', space=sflag, size = 0x4, offset = 0, fixed_abs, tag = 'sflag constant byte address 0x0 - dummy sync flag']
  #allocation18 [shape = 's32[]', space=sflag, size = 0x4, offset = 0, fixed_abs, tag = 'sflag constant byte address 0x0 - dummy sync flag']
  #allocation19 [shape = 's32[]', space=sflag, size = 0x4, offset = 0, fixed_abs, tag = 'sflag constant byte address 0x0 - dummy sync flag']
  #allocation20 [shape = 's32[]', space=sflag, size = 0x4, offset = 0, fixed_abs, tag = 'sflag constant byte address 0x0 - dummy sync flag']
  #allocation21 [shape = 's32[]', space=sflag, size = 0x4, offset = 0, fixed_abs, tag = 'sflag constant byte address 0x0 - dummy sync flag']
  #allocation22 [shape = 's32[]', space=sflag, size = 0x4, offset = 0, fixed_abs, tag = 'sflag constant byte address 0x0 - dummy sync flag']
  #allocation23 [shape = 's32[]', space=sflag, size = 0x4, offset = 0, fixed_abs, tag = 'sflag constant byte address 0x0 - dummy sync flag']
  #allocation24 [shape = 's32[]', space=sflag, size = 0x4, offset = 0, fixed_abs, tag = 'sflag constant byte address 0x0 - dummy sync flag']
  #allocation25 [shape = 's32[]', space=sflag, size = 0x4, offset = 0, fixed_abs, tag = 'sflag constant byte address 0x0 - dummy sync flag']
  #allocation26 [shape = 's32[]', space=sflag, size = 0x4, offset = 0, fixed_abs, tag = 'sflag constant byte address 0x0 - dummy sync flag']
  #allocation27 [shape = 's32[]', space=sflag, size = 0x4, offset = 0, fixed_abs, tag = 'sflag constant byte address 0x0 - dummy sync flag']
  #allocation28 [shape = 's32[]', space=sflag, size = 0x4, offset = 0, fixed_abs, tag = 'sflag constant byte address 0x0 - dummy sync flag']
  #allocation29 [shape = 's32[]', space=sflag, size = 0x4, offset = 0, fixed_abs, tag = 'sflag constant byte address 0x0 - dummy sync flag']
  %s0 = inlined_call_operand.hbm [shape: s32[8], index: 0, kind: input, shape index: {}]
  %s1 = inlined_call_operand.hbm [shape: f32[256,128], index: 1, kind: input, shape index: {}]
  %s2 = inlined_call_operand.hbm [shape: bf16[256,512], index: 2, kind: input, shape index: {}]
  %s3 = inlined_call_operand.vmem [shape: f32[1,512], index: 3, kind: input, shape index: {}]
  %s4 = inlined_call_operand.hbm [shape: f32[8,256], index: 4, kind: input, shape index: {}]
  %s5 = inlined_call_operand.hbm [shape: f32[8,256], index: 5, kind: output, shape index: {}]
  %s6 = sld [smem:[#allocation0]]
  $region62: #{tpu_custom_call.1} parent=0
    _
  %s8 = ssub.s32 1, %s6
  %s9 = scalar_select 0, %s8, %s6
  %11 = dma.hbm_to_smem %s0, 16, [#allocation5], [#allocation4]
  %12 = dma.done [#allocation4], 16
  %13 = sfence
  $region1: #{tpu_custom_call.1} parent=0
    #allocation6 [shape = 'u8[262144]{0}', space=vmem, size = 0x40000, scoped, tag = 'input window, operand 2, single buffered']
    #allocation7 [shape = 's32[1]{0}', space=sflag, size = 0x4, scoped, tag = 'scoped memory for tpu_custom_call.1']
    #allocation8 [shape = 's32[1]{0}', space=sflag, size = 0x4, scoped, tag = 'scoped memory for tpu_custom_call.1']
    #allocation9 [shape = 'u8[8192]{0}', space=vmem, size = 0x2000, scoped, tag = 'input window, operand 4, single buffered']
    #allocation10 [shape = 's32[1]{0}', space=sflag, size = 0x4, scoped, tag = 'scoped memory for tpu_custom_call.1']
    #allocation11 [shape = 'u8[8192]{0}', space=vmem, size = 0x2000, scoped, tag = 'output window, operand 0, single buffered']
    %14 = vsyncpa [#allocation7], 0
    %15 = vsyncpa [#allocation10], 0
    %16 = vsyncpa [#allocation8], 0
    // Predicated region
    $region2: #{tpu_custom_call.1} parent=1 // pred_check
      _
    $region3: #{tpu_custom_call.1} parent=1 // pred_check_branch
      %18 = sbr.rel (0) target = $region5
    $region4: #{tpu_custom_call.1} parent=1 // pred_region
      %s20 = ssub.s32 8192, 8192
      %21 = vsyncadd [#allocation7], %s20
      %s22 = sshll.u32 [#allocation6], 4
      %s23 = int_to_ptr.vmem [resolvable:$true] %s22
      %28 = dma.hbm_to_vmem [thread:$0]  %s2, 8192, %s23, [#allocation7], 256, 256, 16
    $region5: #{tpu_custom_call.1} parent=1 // pred_fallthru
      _
    // Predicated region
    $region6: #{tpu_custom_call.1} parent=1 // pred_check
      _
    $region7: #{tpu_custom_call.1} parent=1 // pred_check_branch
      %30 = sbr.rel (0) target = $region9
    $region8: #{tpu_custom_call.1} parent=1 // pred_region
      _
    $region9: #{tpu_custom_call.1} parent=1 // pred_fallthru
      _
    // Predicated region
    $region10: #{tpu_custom_call.1} parent=1 // pred_check
      _
    $region11: #{tpu_custom_call.1} parent=1 // pred_check_branch
      %32 = sbr.rel (0) target = $region13
    $region12: #{tpu_custom_call.1} parent=1 // pred_region
      %s34 = ssub.s32 256, 256
      %35 = vsyncadd [#allocation10], %s34
      %s37 = sshll.u32 [#allocation9], 4
      %s38 = int_to_ptr.vmem [resolvable:$true] %s37
      %40 = dma.hbm_to_vmem [thread:$0]  %s4, 256, %s38, [#allocation10]
    $region13: #{tpu_custom_call.1} parent=1 // pred_fallthru
      _
    // Predicated region
    $region14: #{tpu_custom_call.1} parent=1 // pred_check
      _
    $region15: #{tpu_custom_call.1} parent=1 // pred_check_branch
      %42 = sbr.rel (0) target = $region17
    $region16: #{tpu_custom_call.1} parent=1 // pred_region
      %43 = dma.done [#allocation7], 8192
    $region17: #{tpu_custom_call.1} parent=1 // pred_fallthru
      _
    // Predicated region
    $region18: #{tpu_custom_call.1} parent=1 // pred_check
      _
    $region19: #{tpu_custom_call.1} parent=1 // pred_check_branch
      %45 = sbr.rel (0) target = $region21
    $region20: #{tpu_custom_call.1} parent=1 // pred_region
      %46 = dma.done [#allocation10], 256
    $region21: #{tpu_custom_call.1} parent=1 // pred_fallthru
      _
    %s47 = sld [smem:[#allocation5]]
    %s48 = smul.addr %s47, 16
    %s49 = scalar_lea.hbm %s1, %s48
    // Predicated region
    $region22: #{tpu_custom_call.1} parent=1 // pred_check
      _
    $region23: #{tpu_custom_call.1} parent=1 // pred_check_branch
      %51 = sbr.rel target = $region25
    $region24: #{tpu_custom_call.1} parent=1 // pred_region
      %52 = sst [smem:[#allocation14]] [#allocation13]
      %53 = sst [smem:[#allocation15]] [#allocation12]
    $region25: #{tpu_custom_call.1} parent=1 // pred_fallthru
      _
    %55 = shalt.err (0)
    %s57 = sshll.u32 [#allocation2], 4
    %s58 = int_to_ptr.vmem [resolvable:$true] %s57
    %60 = dma.hbm_to_vmem [thread:$0]  %s49, 16, %s58, [#allocation3]
    %s61 = sld [smem:[#allocation5 + $0x1]]
    %s62 = smul.addr %s61, 16
    %s63 = scalar_lea.hbm %s1, %s62
    %s64 = scalar_lea.vmem [#allocation2], 1
    %s65 = scalar_lea.sflag [#allocation3], 1
    // Predicated region
    $region26: #{tpu_custom_call.1} parent=1 // pred_check
      _
    $region27: #{tpu_custom_call.1} parent=1 // pred_check_branch
      %67 = sbr.rel target = $region29
    $region28: #{tpu_custom_call.1} parent=1 // pred_region
      %68 = sst [smem:[#allocation14]] [#allocation17]
      %69 = sst [smem:[#allocation15]] [#allocation16]
    $region29: #{tpu_custom_call.1} parent=1 // pred_fallthru
      _
    %71 = shalt.err (0)
    %s73 = sshll.u32 %s64, 4
    %s74 = int_to_ptr.vmem [resolvable:$true] %s73
    %76 = dma.hbm_to_vmem [thread:$0]  %s63, 16, %s74, %s65
    %s77 = sld [smem:[#allocation5 + $0x2]]
    %s78 = smul.addr %s77, 16
    %s79 = scalar_lea.hbm %s1, %s78
    %s80 = scalar_lea.vmem [#allocation2], 2
    %s81 = scalar_lea.sflag [#allocation3], 2
    // Predicated region
    $region30: #{tpu_custom_call.1} parent=1 // pred_check
      _
    $region31: #{tpu_custom_call.1} parent=1 // pred_check_branch
      %83 = sbr.rel target = $region33
    $region32: #{tpu_custom_call.1} parent=1 // pred_region
      %84 = sst [smem:[#allocation14]] [#allocation19]
      %85 = sst [smem:[#allocation15]] [#allocation18]
    $region33: #{tpu_custom_call.1} parent=1 // pred_fallthru
      _
    %87 = shalt.err (0)
    %s89 = sshll.u32 %s80, 4
    %s90 = int_to_ptr.vmem [resolvable:$true] %s89
    %92 = dma.hbm_to_vmem [thread:$0]  %s79, 16, %s90, %s81
    %s93 = sld [smem:[#allocation5 + $0x3]]
    %s94 = smul.addr %s93, 16
    %s95 = scalar_lea.hbm %s1, %s94
    %s96 = scalar_lea.vmem [#allocation2], 3
    %s97 = scalar_lea.sflag [#allocation3], 3
    // Predicated region
    $region34: #{tpu_custom_call.1} parent=1 // pred_check
      _
    $region35: #{tpu_custom_call.1} parent=1 // pred_check_branch
      %99 = sbr.rel target = $region37
    $region36: #{tpu_custom_call.1} parent=1 // pred_region
      %100 = sst [smem:[#allocation14]] [#allocation21]
      %101 = sst [smem:[#allocation15]] [#allocation20]
    $region37: #{tpu_custom_call.1} parent=1 // pred_fallthru
      _
    %103 = shalt.err (0)
    %s105 = sshll.u32 %s96, 4
    %s106 = int_to_ptr.vmem [resolvable:$true] %s105
    %108 = dma.hbm_to_vmem [thread:$0]  %s95, 16, %s106, %s97
    %s109 = sld [smem:[#allocation5 + $0x4]]
    %s110 = smul.addr %s109, 16
    %s111 = scalar_lea.hbm %s1, %s110
    %s112 = scalar_lea.vmem [#allocation2], 4
    %s113 = scalar_lea.sflag [#allocation3], 4
    // Predicated region
    $region38: #{tpu_custom_call.1} parent=1 // pred_check
      _
    $region39: #{tpu_custom_call.1} parent=1 // pred_check_branch
      %115 = sbr.rel target = $region41
    $region40: #{tpu_custom_call.1} parent=1 // pred_region
      %116 = sst [smem:[#allocation14]] [#allocation23]
      %117 = sst [smem:[#allocation15]] [#allocation22]
    $region41: #{tpu_custom_call.1} parent=1 // pred_fallthru
      _
    %119 = shalt.err (0)
    %s121 = sshll.u32 %s112, 4
    %s122 = int_to_ptr.vmem [resolvable:$true] %s121
    %124 = dma.hbm_to_vmem [thread:$0]  %s111, 16, %s122, %s113
    %s125 = sld [smem:[#allocation5 + $0x5]]
    %s126 = smul.addr %s125, 16
    %s127 = scalar_lea.hbm %s1, %s126
    %s128 = scalar_lea.vmem [#allocation2], 5
    %s129 = scalar_lea.sflag [#allocation3], 5
    // Predicated region
    $region42: #{tpu_custom_call.1} parent=1 // pred_check
      _
    $region43: #{tpu_custom_call.1} parent=1 // pred_check_branch
      %131 = sbr.rel target = $region45
    $region44: #{tpu_custom_call.1} parent=1 // pred_region
      %132 = sst [smem:[#allocation14]] [#allocation25]
      %133 = sst [smem:[#allocation15]] [#allocation24]
    $region45: #{tpu_custom_call.1} parent=1 // pred_fallthru
      _
    %135 = shalt.err (0)
    %s137 = sshll.u32 %s128, 4
    %s138 = int_to_ptr.vmem [resolvable:$true] %s137
    %140 = dma.hbm_to_vmem [thread:$0]  %s127, 16, %s138, %s129
    %s141 = sld [smem:[#allocation5 + $0x6]]
    %s142 = smul.addr %s141, 16
    %s143 = scalar_lea.hbm %s1, %s142
    %s144 = scalar_lea.vmem [#allocation2], 6
    %s145 = scalar_lea.sflag [#allocation3], 6
    // Predicated region
    $region46: #{tpu_custom_call.1} parent=1 // pred_check
      _
    $region47: #{tpu_custom_call.1} parent=1 // pred_check_branch
      %147 = sbr.rel target = $region49
    $region48: #{tpu_custom_call.1} parent=1 // pred_region
      %148 = sst [smem:[#allocation14]] [#allocation27]
      %149 = sst [smem:[#allocation15]] [#allocation26]
    $region49: #{tpu_custom_call.1} parent=1 // pred_fallthru
      _
    %151 = shalt.err (0)
    %s153 = sshll.u32 %s144, 4
    %s154 = int_to_ptr.vmem [resolvable:$true] %s153
    %156 = dma.hbm_to_vmem [thread:$0]  %s143, 16, %s154, %s145
    %s157 = sld [smem:[#allocation5 + $0x7]]
    %s158 = smul.addr %s157, 16
    %s159 = scalar_lea.hbm %s1, %s158
    %s160 = scalar_lea.vmem [#allocation2], 7
    %s161 = scalar_lea.sflag [#allocation3], 7
    // Predicated region
    $region50: #{tpu_custom_call.1} parent=1 // pred_check
      _
    $region51: #{tpu_custom_call.1} parent=1 // pred_check_branch
      %163 = sbr.rel target = $region53
    $region52: #{tpu_custom_call.1} parent=1 // pred_region
      %164 = sst [smem:[#allocation14]] [#allocation29]
      %165 = sst [smem:[#allocation15]] [#allocation28]
    $region53: #{tpu_custom_call.1} parent=1 // pred_fallthru
      _
    %167 = shalt.err (0)
    %s169 = sshll.u32 %s160, 4
    %s170 = int_to_ptr.vmem [resolvable:$true] %s169
    %172 = dma.hbm_to_vmem [thread:$0]  %s159, 16, %s170, %s161
    %s173 = smul.u32 1, 1
    %s174 = sshll.u32 %s173, 4
    %175 = dma.done [#allocation3], %s174
    %s176 = sshll.u32 %s173, 4
    %177 = dma.done %s65, %s176
    %s178 = sshll.u32 %s173, 4
    %179 = dma.done %s81, %s178
    %s180 = sshll.u32 %s173, 4
    %181 = dma.done %s97, %s180
    %s182 = sshll.u32 %s173, 4
    %183 = dma.done %s113, %s182
    %s184 = sshll.u32 %s173, 4
    %185 = dma.done %s129, %s184
    %s186 = sshll.u32 %s173, 4
    %187 = dma.done %s145, %s186
    %s188 = sshll.u32 %s173, 4
    %189 = dma.done %s161, %s188
    %v190 = vld [vmem:[#allocation9] sm:$0xff]
    %v191 = vld [vmem:[#allocation9 + $0x8] sm:$0xff]
    %v192 = vld [vmem:[#allocation2] sm:$0xff]
    %v193 = vpack.c.bf16 %v192, %v192
    %v194 = vpack.c.bf16 %v190, %v190
    %v195 = vld [vmem:[#allocation6] sm:$0xff]
    %v196 = vld [vmem:[#allocation6 + $0x8] sm:$0xff]
    %v197 = vld [vmem:[#allocation6 + $0x10] sm:$0xff]
    %v198 = vld [vmem:[#allocation6 + $0x18] sm:$0xff]
    %v199 = vld [vmem:[#allocation6 + $0x20] sm:$0xff]
    %v200 = vld [vmem:[#allocation6 + $0x28] sm:$0xff]
    %v201 = vld [vmem:[#allocation6 + $0x30] sm:$0xff]
    %v202 = vld [vmem:[#allocation6 + $0x38] sm:$0xff]
    %v203 = vld [vmem:[#allocation6 + $0x40] sm:$0xff]
    %v204 = vld [vmem:[#allocation6 + $0x48] sm:$0xff]
    %v205 = vld [vmem:[#allocation6 + $0x50] sm:$0xff]
    %v206 = vld [vmem:[#allocation6 + $0x58] sm:$0xff]
    %v207 = vld [vmem:[#allocation6 + $0x60] sm:$0xff]
    %v208 = vld [vmem:[#allocation6 + $0x68] sm:$0xff]
    %v209 = vld [vmem:[#allocation6 + $0x70] sm:$0xff]
    %v210 = vld [vmem:[#allocation6 + $0x78] sm:$0xff]
    %v211 = vld [vmem:[#allocation6 + $0x80] sm:$0xff]
    %v212 = vld [vmem:[#allocation6 + $0x88] sm:$0xff]
    %v213 = vld [vmem:[#allocation6 + $0x90] sm:$0xff]
    %v214 = vld [vmem:[#allocation6 + $0x98] sm:$0xff]
    %v215 = vld [vmem:[#allocation6 + $0xa0] sm:$0xff]
    %v216 = vld [vmem:[#allocation6 + $0xa8] sm:$0xff]
    %v217 = vld [vmem:[#allocation6 + $0xb0] sm:$0xff]
    %v218 = vld [vmem:[#allocation6 + $0xb8] sm:$0xff]
    %v219 = vld [vmem:[#allocation6 + $0xc0] sm:$0xff]
    %v220 = vld [vmem:[#allocation6 + $0xc8] sm:$0xff]
    %v221 = vld [vmem:[#allocation6 + $0xd0] sm:$0xff]
    %v222 = vld [vmem:[#allocation6 + $0xd8] sm:$0xff]
    %v223 = vld [vmem:[#allocation6 + $0xe0] sm:$0xff]
    %v224 = vld [vmem:[#allocation6 + $0xe8] sm:$0xff]
    %v225 = vld [vmem:[#allocation6 + $0xf0] sm:$0xff]
    %v226 = vld [vmem:[#allocation6 + $0xf8] sm:$0xff]
    %v227 = vld [vmem:[#allocation6 + $0x100] sm:$0xff]
    %v228 = vld [vmem:[#allocation6 + $0x108] sm:$0xff]
    %v229 = vld [vmem:[#allocation6 + $0x110] sm:$0xff]
    %v230 = vld [vmem:[#allocation6 + $0x118] sm:$0xff]
    %v231 = vld [vmem:[#allocation6 + $0x120] sm:$0xff]
    %v232 = vld [vmem:[#allocation6 + $0x128] sm:$0xff]
    %v233 = vld [vmem:[#allocation6 + $0x130] sm:$0xff]
    %v234 = vld [vmem:[#allocation6 + $0x138] sm:$0xff]
    %v235 = vld [vmem:[#allocation6 + $0x140] sm:$0xff]
    %v236 = vld [vmem:[#allocation6 + $0x148] sm:$0xff]
    %v237 = vld [vmem:[#allocation6 + $0x150] sm:$0xff]
    %v238 = vld [vmem:[#allocation6 + $0x158] sm:$0xff]
    %v239 = vld [vmem:[#allocation6 + $0x160] sm:$0xff]
    %v240 = vld [vmem:[#allocation6 + $0x168] sm:$0xff]
    %v241 = vld [vmem:[#allocation6 + $0x170] sm:$0xff]
    %v242 = vld [vmem:[#allocation6 + $0x178] sm:$0xff]
    %v243 = vld [vmem:[#allocation6 + $0x180] sm:$0xff]
    %v244 = vld [vmem:[#allocation6 + $0x188] sm:$0xff]
    %v245 = vld [vmem:[#allocation6 + $0x190] sm:$0xff]
    %v246 = vld [vmem:[#allocation6 + $0x198] sm:$0xff]
    %v247 = vld [vmem:[#allocation6 + $0x1a0] sm:$0xff]
    %v248 = vld [vmem:[#allocation6 + $0x1a8] sm:$0xff]
    %v249 = vld [vmem:[#allocation6 + $0x1b0] sm:$0xff]
    %v250 = vld [vmem:[#allocation6 + $0x1b8] sm:$0xff]
    %v251 = vld [vmem:[#allocation6 + $0x1c0] sm:$0xff]
    %v252 = vld [vmem:[#allocation6 + $0x1c8] sm:$0xff]
    %v253 = vld [vmem:[#allocation6 + $0x1d0] sm:$0xff]
    %v254 = vld [vmem:[#allocation6 + $0x1d8] sm:$0xff]
    %v255 = vld [vmem:[#allocation6 + $0x1e0] sm:$0xff]
    %v256 = vld [vmem:[#allocation6 + $0x1e8] sm:$0xff]
    %v257 = vld [vmem:[#allocation6 + $0x1f0] sm:$0xff]
    %v258 = vld [vmem:[#allocation6 + $0x1f8] sm:$0xff]
    %v259 = vld [vmem:[%s3] sm:$0xf]
    %v261 = vlaneseq
    %v262 = vshrl.u32 %v261, 7
    %v263 = vsub.s32 0, %v262
    %v264 = vrot.slane %v259, %v263
    %v265 = vlaneseq
    %v266 = vshrl.u32 %v265, 7
    %v267 = vsub.s32 1, %v266
    %v268 = vrot.slane %v259, %v267
    %v269 = vlaneseq
    %v270 = vshrl.u32 %v269, 7
    %v271 = vsub.s32 2, %v270
    %v272 = vrot.slane %v259, %v271
    %v273 = vlaneseq
    %v274 = vshrl.u32 %v273, 7
    %v275 = vsub.s32 3, %v274
    %v276 = vrot.slane %v259, %v275
    %v345 = vunpack.c.l.b16 %v195
    %v346 = vunpack.c.h.b16 %v195
    %v347 = vunpack.c.l.b16 %v196
    %v348 = vunpack.c.h.b16 %v196
    %v349 = vunpack.c.l.b16 %v197
    %v350 = vunpack.c.h.b16 %v197
    %v351 = vunpack.c.l.b16 %v198
    %v352 = vunpack.c.h.b16 %v198
    %v353 = vunpack.c.l.b16 %v199
    %v354 = vunpack.c.h.b16 %v199
    %v355 = vunpack.c.l.b16 %v200
    %v356 = vunpack.c.h.b16 %v200
    %v357 = vunpack.c.l.b16 %v201
    %v358 = vunpack.c.h.b16 %v201
    %v359 = vunpack.c.l.b16 %v202
    %v360 = vunpack.c.h.b16 %v202
    %v361 = vunpack.c.l.b16 %v203
    %v362 = vunpack.c.h.b16 %v203
    %v363 = vunpack.c.l.b16 %v204
    %v364 = vunpack.c.h.b16 %v204
    %v365 = vunpack.c.l.b16 %v205
    %v366 = vunpack.c.h.b16 %v205
    %v367 = vunpack.c.l.b16 %v206
    %v368 = vunpack.c.h.b16 %v206
    %v369 = vunpack.c.l.b16 %v207
    %v370 = vunpack.c.h.b16 %v207
    %v371 = vunpack.c.l.b16 %v208
    %v372 = vunpack.c.h.b16 %v208
    %v373 = vunpack.c.l.b16 %v209
    %v374 = vunpack.c.h.b16 %v209
    %v375 = vunpack.c.l.b16 %v210
    %v376 = vunpack.c.h.b16 %v210
    %v377 = vunpack.c.l.b16 %v211
    %v378 = vunpack.c.h.b16 %v211
    %v379 = vunpack.c.l.b16 %v212
    %v380 = vunpack.c.h.b16 %v212
    %v381 = vunpack.c.l.b16 %v213
    %v382 = vunpack.c.h.b16 %v213
    %v383 = vunpack.c.l.b16 %v214
    %v384 = vunpack.c.h.b16 %v214
    %v385 = vunpack.c.l.b16 %v215
    %v386 = vunpack.c.h.b16 %v215
    %v387 = vunpack.c.l.b16 %v216
    %v388 = vunpack.c.h.b16 %v216
    %v389 = vunpack.c.l.b16 %v217
    %v390 = vunpack.c.h.b16 %v217
    %v391 = vunpack.c.l.b16 %v218
    %v392 = vunpack.c.h.b16 %v218
    %v393 = vunpack.c.l.b16 %v219
    %v394 = vunpack.c.h.b16 %v219
    %v395 = vunpack.c.l.b16 %v220
    %v396 = vunpack.c.h.b16 %v220
    %v397 = vunpack.c.l.b16 %v221
    %v398 = vunpack.c.h.b16 %v221
    %v399 = vunpack.c.l.b16 %v222
    %v400 = vunpack.c.h.b16 %v222
    %v401 = vunpack.c.l.b16 %v223
    %v402 = vunpack.c.h.b16 %v223
    %v403 = vunpack.c.l.b16 %v224
    %v404 = vunpack.c.h.b16 %v224
    %v405 = vunpack.c.l.b16 %v225
    %v406 = vunpack.c.h.b16 %v225
    %v407 = vunpack.c.l.b16 %v226
    %v408 = vunpack.c.h.b16 %v226
    %v409 = vunpack.c.l.b16 %v227
    %v410 = vunpack.c.h.b16 %v227
    %v411 = vunpack.c.l.b16 %v228
    %v412 = vunpack.c.h.b16 %v228
    %v413 = vunpack.c.l.b16 %v229
    %v414 = vunpack.c.h.b16 %v229
    %v415 = vunpack.c.l.b16 %v230
    %v416 = vunpack.c.h.b16 %v230
    %v417 = vunpack.c.l.b16 %v231
    %v418 = vunpack.c.h.b16 %v231
    %v419 = vunpack.c.l.b16 %v232
    %v420 = vunpack.c.h.b16 %v232
    %v421 = vunpack.c.l.b16 %v233
    %v422 = vunpack.c.h.b16 %v233
    %v423 = vunpack.c.l.b16 %v234
    %v424 = vunpack.c.h.b16 %v234
    %v425 = vunpack.c.l.b16 %v235
    %v426 = vunpack.c.h.b16 %v235
    %v427 = vunpack.c.l.b16 %v236
    %v428 = vunpack.c.h.b16 %v236
    %v429 = vunpack.c.l.b16 %v237
    %v430 = vunpack.c.h.b16 %v237
    %v431 = vunpack.c.l.b16 %v238
    %v432 = vunpack.c.h.b16 %v238
    %v433 = vunpack.c.l.b16 %v239
    %v434 = vunpack.c.h.b16 %v239
    %v435 = vunpack.c.l.b16 %v240
    %v436 = vunpack.c.h.b16 %v240
    %v437 = vunpack.c.l.b16 %v241
    %v438 = vunpack.c.h.b16 %v241
    %v439 = vunpack.c.l.b16 %v242
    %v440 = vunpack.c.h.b16 %v242
    %v441 = vunpack.c.l.b16 %v243
    %v442 = vunpack.c.h.b16 %v243
    %v443 = vunpack.c.l.b16 %v244
    %v444 = vunpack.c.h.b16 %v244
    %v445 = vunpack.c.l.b16 %v245
    %v446 = vunpack.c.h.b16 %v245
    %v447 = vunpack.c.l.b16 %v246
    %v448 = vunpack.c.h.b16 %v246
    %v449 = vunpack.c.l.b16 %v247
    %v450 = vunpack.c.h.b16 %v247
    %v451 = vunpack.c.l.b16 %v248
    %v452 = vunpack.c.h.b16 %v248
    %v453 = vunpack.c.l.b16 %v249
    %v454 = vunpack.c.h.b16 %v249
    %v455 = vunpack.c.l.b16 %v250
    %v456 = vunpack.c.h.b16 %v250
    %v457 = vunpack.c.l.b16 %v251
    %v458 = vunpack.c.h.b16 %v251
    %v459 = vunpack.c.l.b16 %v252
    %v460 = vunpack.c.h.b16 %v252
    %v461 = vunpack.c.l.b16 %v253
    %v462 = vunpack.c.h.b16 %v253
    %v463 = vunpack.c.l.b16 %v254
    %v464 = vunpack.c.h.b16 %v254
    %v465 = vunpack.c.l.b16 %v255
    %v466 = vunpack.c.h.b16 %v255
    %v467 = vunpack.c.l.b16 %v256
    %v468 = vunpack.c.h.b16 %v256
    %v469 = vunpack.c.l.b16 %v257
    %v470 = vunpack.c.h.b16 %v257
    %v471 = vunpack.c.l.b16 %v258
    %v472 = vunpack.c.h.b16 %v258
    %v473 = vpack.c.b16 %v349, %v345
    %v474 = vpack.c.b16 %v350, %v346
    %v475 = vpack.c.b16 %v351, %v347
    %v476 = vpack.c.b16 %v352, %v348
    %v477 = vpack.c.b16 %v357, %v353
    %v478 = vpack.c.b16 %v358, %v354
    %v479 = vpack.c.b16 %v359, %v355
    %v480 = vpack.c.b16 %v360, %v356
    %v481 = vpack.c.b16 %v365, %v361
    %v482 = vpack.c.b16 %v366, %v362
    %v483 = vpack.c.b16 %v367, %v363
    %v484 = vpack.c.b16 %v368, %v364
    %v485 = vpack.c.b16 %v373, %v369
    %v486 = vpack.c.b16 %v374, %v370
    %v487 = vpack.c.b16 %v375, %v371
    %v488 = vpack.c.b16 %v376, %v372
    %v489 = vpack.c.b16 %v381, %v377
    %v490 = vpack.c.b16 %v382, %v378
    %v491 = vpack.c.b16 %v383, %v379
    %v492 = vpack.c.b16 %v384, %v380
    %v493 = vpack.c.b16 %v389, %v385
    %v494 = vpack.c.b16 %v390, %v386
    %v495 = vpack.c.b16 %v391, %v387
    %v496 = vpack.c.b16 %v392, %v388
    %v497 = vpack.c.b16 %v397, %v393
    %v498 = vpack.c.b16 %v398, %v394
    %v499 = vpack.c.b16 %v399, %v395
    %v500 = vpack.c.b16 %v400, %v396
    %v501 = vpack.c.b16 %v405, %v401
    %v502 = vpack.c.b16 %v406, %v402
    %v503 = vpack.c.b16 %v407, %v403
    %v504 = vpack.c.b16 %v408, %v404
    %v505 = vpack.c.b16 %v413, %v409
    %v506 = vpack.c.b16 %v414, %v410
    %v507 = vpack.c.b16 %v415, %v411
    %v508 = vpack.c.b16 %v416, %v412
    %v509 = vpack.c.b16 %v421, %v417
    %v510 = vpack.c.b16 %v422, %v418
    %v511 = vpack.c.b16 %v423, %v419
    %v512 = vpack.c.b16 %v424, %v420
    %v513 = vpack.c.b16 %v429, %v425
    %v514 = vpack.c.b16 %v430, %v426
    %v515 = vpack.c.b16 %v431, %v427
    %v516 = vpack.c.b16 %v432, %v428
    %v517 = vpack.c.b16 %v437, %v433
    %v518 = vpack.c.b16 %v438, %v434
    %v519 = vpack.c.b16 %v439, %v435
    %v520 = vpack.c.b16 %v440, %v436
    %v521 = vpack.c.b16 %v445, %v441
    %v522 = vpack.c.b16 %v446, %v442
    %v523 = vpack.c.b16 %v447, %v443
    %v524 = vpack.c.b16 %v448, %v444
    %v525 = vpack.c.b16 %v453, %v449
    %v526 = vpack.c.b16 %v454, %v450
    %v527 = vpack.c.b16 %v455, %v451
    %v528 = vpack.c.b16 %v456, %v452
    %v529 = vpack.c.b16 %v461, %v457
    %v530 = vpack.c.b16 %v462, %v458
    %v531 = vpack.c.b16 %v463, %v459
    %v532 = vpack.c.b16 %v464, %v460
    %v533 = vpack.c.b16 %v469, %v465
    %v534 = vpack.c.b16 %v470, %v466
    %v535 = vpack.c.b16 %v471, %v467
    %v536 = vpack.c.b16 %v472, %v468
    %601 = vmatprep.subr.bf16.mxu0 %v474
    %602 = vmatpush1.bf16.msra.mxu0 %v473
    %603 = vmatprep.subr.bf16.mxu0 %v478
    %604 = vmatpush1.bf16.msra.mxu0 %v477
    %605 = vmatprep.subr.bf16.mxu0 %v482
    %606 = vmatpush1.bf16.msra.mxu0 %v481
    %607 = vmatprep.subr.bf16.mxu0 %v486
    %608 = vmatpush1.bf16.msra.mxu0 %v485
    %609 = vmatprep.subr.bf16.mxu0 %v490
    %610 = vmatpush1.bf16.msra.mxu0 %v489
    %611 = vmatprep.subr.bf16.mxu0 %v494
    %612 = vmatpush1.bf16.msra.mxu0 %v493
    %613 = vmatprep.subr.bf16.mxu0 %v498
    %614 = vmatpush1.bf16.msra.mxu0 %v497
    %615 = vmatprep.subr.bf16.mxu0 %v502
    %616 = vmatpush1.bf16.msra.mxu0 %v501
    %617 = vmatprep.subr.bf16.mxu0 %v506
    %618 = vmatpush1.bf16.msra.mxu0 %v505
    %619 = vmatprep.subr.bf16.mxu0 %v510
    %620 = vmatpush1.bf16.msra.mxu0 %v509
    %621 = vmatprep.subr.bf16.mxu0 %v514
    %622 = vmatpush1.bf16.msra.mxu0 %v513
    %623 = vmatprep.subr.bf16.mxu0 %v518
    %624 = vmatpush1.bf16.msra.mxu0 %v517
    %625 = vmatprep.subr.bf16.mxu0 %v522
    %626 = vmatpush1.bf16.msra.mxu0 %v521
    %627 = vmatprep.subr.bf16.mxu0 %v526
    %628 = vmatpush1.bf16.msra.mxu0 %v525
    %629 = vmatprep.subr.bf16.mxu0 %v530
    %630 = vmatpush1.bf16.msra.mxu0 %v529
    %631 = vmatprep.subr.bf16.mxu0 %v534
    %632 = vmatpush1.bf16.msra.mxu0 %v533
    %633 = vmatprep.mubr.bf16.mxu0 %v194
    %634 = vmatmul.mubr.bf16.gmra.mrb[0].mxu0 %v193
    %v635 = vpop.f32.mrb[0].mxu0
    %v636 = vadd.f32 %v264, %v635
    %v637 = vpop.f32.mrb[0].mxu0
    %v638 = vadd.f32 %v268, %v637
    %v639 = vpop.f32.mrb[0].mxu0
    %v640 = vpop.f32.mrb[0].mxu0
    %641 = vdwg.mxu0
    %642 = vmatprep.subr.bf16.mxu0 %v476
    %643 = vmatpush1.bf16.msra.mxu0 %v475
    %644 = vmatprep.subr.bf16.mxu0 %v480
    %645 = vmatpush1.bf16.msra.mxu0 %v479
    %646 = vmatprep.subr.bf16.mxu0 %v484
    %647 = vmatpush1.bf16.msra.mxu0 %v483
    %648 = vmatprep.subr.bf16.mxu0 %v488
    %649 = vmatpush1.bf16.msra.mxu0 %v487
    %650 = vmatprep.subr.bf16.mxu0 %v492
    %651 = vmatpush1.bf16.msra.mxu0 %v491
    %652 = vmatprep.subr.bf16.mxu0 %v496
    %653 = vmatpush1.bf16.msra.mxu0 %v495
    %654 = vmatprep.subr.bf16.mxu0 %v500
    %655 = vmatpush1.bf16.msra.mxu0 %v499
    %656 = vmatprep.subr.bf16.mxu0 %v504
    %657 = vmatpush1.bf16.msra.mxu0 %v503
    %658 = vmatprep.subr.bf16.mxu0 %v508
    %659 = vmatpush1.bf16.msra.mxu0 %v507
    %660 = vmatprep.subr.bf16.mxu0 %v512
    %661 = vmatpush1.bf16.msra.mxu0 %v511
    %662 = vmatprep.subr.bf16.mxu0 %v516
    %663 = vmatpush1.bf16.msra.mxu0 %v515
    %664 = vmatprep.subr.bf16.mxu0 %v520
    %665 = vmatpush1.bf16.msra.mxu0 %v519
    %666 = vmatprep.subr.bf16.mxu0 %v524
    %667 = vmatpush1.bf16.msra.mxu0 %v523
    %668 = vmatprep.subr.bf16.mxu0 %v528
    %669 = vmatpush1.bf16.msra.mxu0 %v527
    %670 = vmatprep.subr.bf16.mxu0 %v532
    %671 = vmatpush1.bf16.msra.mxu0 %v531
    %672 = vmatprep.subr.bf16.mxu0 %v536
    %673 = vmatpush1.bf16.msra.mxu0 %v535
    %674 = vmatprep.mubr.bf16.mxu0 %v194
    %675 = vmatmul.mubr.bf16.gmra.mrb[0].mxu0 %v193
    %v676 = vpop.f32.mrb[0].mxu0
    %v677 = vadd.f32 %v272, %v676
    %v678 = vpop.f32.mrb[0].mxu0
    %v679 = vadd.f32 %v276, %v678
    %v680 = vpop.f32.mrb[0].mxu0
    %v681 = vpop.f32.mrb[0].mxu0
    %682 = vdwg.mxu0
    %v683 = vxor.u32 %v636, 2147483648
    %v684 = vmul.f32 %v683, 1.442695
    %v685 = vpow.pop %v684
    %v686 = vadd.f32 %v685, 1.0
    %v687 = vrcp.pop %v686
    %v688 = vmul.f32 1.0, %v687
    %v689 = vxor.u32 %v638, 2147483648
    %v690 = vmul.f32 %v689, 1.442695
    %v691 = vpow.pop %v690
    %v692 = vadd.f32 %v691, 1.0
    %v693 = vrcp.pop %v692
    %v694 = vmul.f32 1.0, %v693
    %v695 = vtanh.pop %v677
    %v696 = vxor.u32 %v679, 2147483648
    %v697 = vmul.f32 %v696, 1.442695
    %v698 = vpow.pop %v697
    %v699 = vadd.f32 %v698, 1.0
    %v700 = vrcp.pop %v699
    %v701 = vmul.f32 1.0, %v700
    %v702 = vmul.f32 %v694, %v191
    %v703 = vmul.f32 %v688, %v695
    %v704 = vadd.f32 %v702, %v703
    %v705 = vtanh.pop %v704
    %v706 = vmul.f32 %v701, %v705
    %707 = vst [vmem:[#allocation11] sm:$0xff] %v706
    %708 = vst [vmem:[#allocation11 + $0x8] sm:$0xff] %v704
    // Predicated region
    $region54: #{tpu_custom_call.1} parent=1 // pred_check
      _
    $region55: #{tpu_custom_call.1} parent=1 // pred_check_branch
      %710 = sbr.rel (0) target = $region57
    $region56: #{tpu_custom_call.1} parent=1 // pred_region
      %s712 = ssub.s32 256, 256
      %713 = vsyncadd [#allocation8], %s712
      %s715 = sshll.u32 [#allocation11], 4
      %s716 = int_to_ptr.vmem [resolvable:$true] %s715
      %718 = dma.vmem_to_hbm [thread:$0]  %s716, 256, %s5, [#allocation8]
    $region57: #{tpu_custom_call.1} parent=1 // pred_fallthru
      _
    // Predicated region
    $region58: #{tpu_custom_call.1} parent=1 // pred_check
      _
    $region59: #{tpu_custom_call.1} parent=1 // pred_check_branch
      %720 = sbr.rel (0) target = $region61
    $region60: #{tpu_custom_call.1} parent=1 // pred_region
      %721 = dma.done [#allocation8], 256
    $region61: #{tpu_custom_call.1} parent=1 // pred_fallthru
      _
    %722 = vsyncpa [#allocation7], 1
    %723 = vsyncpa [#allocation10], 1
    %724 = vsyncpa [#allocation8], 1
  %725 = vsyncmov [#allocation3]
  %s726 = vpop.sfrf %725
  %p727 = scmp.eq.s32.totalorder %s726, 0
  %p728 = pneg %p727
  %730 = shalt.err (%p728)
  %s731 = scalar_lea.sflag [#allocation3], 1
  %732 = vsyncmov %s731
  %s733 = vpop.sfrf %732
  %p734 = scmp.eq.s32.totalorder %s733, 0
  %p735 = pneg %p734
  %737 = shalt.err (%p735)
  %s738 = scalar_lea.sflag [#allocation3], 2
  %739 = vsyncmov %s738
  %s740 = vpop.sfrf %739
  %p741 = scmp.eq.s32.totalorder %s740, 0
  %p742 = pneg %p741
  %744 = shalt.err (%p742)
  %s745 = scalar_lea.sflag [#allocation3], 3
  %746 = vsyncmov %s745
  %s747 = vpop.sfrf %746
  %p748 = scmp.eq.s32.totalorder %s747, 0
  %p749 = pneg %p748
  %751 = shalt.err (%p749)
  %s752 = scalar_lea.sflag [#allocation3], 4
  %753 = vsyncmov %s752
  %s754 = vpop.sfrf %753
  %p755 = scmp.eq.s32.totalorder %s754, 0
  %p756 = pneg %p755
  %758 = shalt.err (%p756)
  %s759 = scalar_lea.sflag [#allocation3], 5
  %760 = vsyncmov %s759
  %s761 = vpop.sfrf %760
  %p762 = scmp.eq.s32.totalorder %s761, 0
  %p763 = pneg %p762
  %765 = shalt.err (%p763)
  %s766 = scalar_lea.sflag [#allocation3], 6
  %767 = vsyncmov %s766
  %s768 = vpop.sfrf %767
  %p769 = scmp.eq.s32.totalorder %s768, 0
  %p770 = pneg %p769
  %772 = shalt.err (%p770)
  %s773 = scalar_lea.sflag [#allocation3], 7
  %774 = vsyncmov %s773
  %s775 = vpop.sfrf %774
  %p776 = scmp.eq.s32.totalorder %s775, 0
  %p777 = pneg %p776
  %779 = shalt.err (%p777)

</llo_original>
